<compile_context>
chip_gen: v5e
topology: v5e:2x2
jax: 0.10.0
libtpu: 0.0.40
codegen_flags: <defaults>
</compile_context>

<pallas_src>
import math

import jax
import jax.numpy as jnp
from jax.experimental import pallas as pl
from jax.experimental.pallas import tpu as pltpu

_INV_SQRT2 = 1.0 / math.sqrt(2.0)
_LN_EPS = 1e-5  # PyTorch nn.LayerNorm default


def _ff_kernel(x_ref, w1_ref, b1_ref, w2_ref, b2_ref, gamma_ref, beta_ref,
               o_ref, acc_ref):
    # x_ref: (tm, E) bf16 (resident across the F axis)
    # w1_ref: (E, tf) bf16   b1_ref: (1, tf) f32
    # w2_ref: (tf, E) bf16   b2/gamma/beta: (1, E) f32
    # acc_ref: (tm, E) f32 scratch accumulator (resident across the F axis)
    k = pl.program_id(1)

    @pl.when(k == 0)
    def _init():
        acc_ref[...] = jnp.zeros_like(acc_ref)

    # ---- linear1 on this F-slice: bf16 operands, f32 accumulation ----
    h = jnp.dot(x_ref[...], w1_ref[...], preferred_element_type=jnp.float32)
    h = h + b1_ref[...]

    # exact (erf-based) GELU, matching torch.nn.functional.gelu default
    h = 0.5 * h * (1.0 + jax.lax.erf(h * _INV_SQRT2))
    # dropout: identity (eval mode)

    # ---- linear2 partial sum over this F-slice ----
    acc_ref[...] += jnp.dot(h.astype(jnp.bfloat16), w2_ref[...],
                            preferred_element_type=jnp.float32)

    # ---- finalize: bias2, residual, LayerNorm (all in f32) ----
    @pl.when(k == pl.num_programs(1) - 1)
    def _finalize():
        y = acc_ref[...] + b2_ref[...] + x_ref[...].astype(jnp.float32)
        mean = jnp.mean(y, axis=-1, keepdims=True)
        var = jnp.mean((y - mean) ** 2, axis=-1, keepdims=True)
        y_n = (y - mean) * jax.lax.rsqrt(var + _LN_EPS)
        o_ref[...] = (y_n * gamma_ref[...] + beta_ref[...]).astype(o_ref.dtype)


def _round_up(a, b):
    return (a + b - 1) // b * b


def _cdiv(a, b):
    return (a + b - 1) // b


def _vmem_capacity_bytes():
    """Physical VMEM of the current chip; conservative (v7x-sized) fallback."""
    try:
        info = pltpu.get_tpu_info()
        for name in ("vmem_capacity_bytes", "vmem_bytes", "vmem_size_bytes"):
            v = getattr(info, name, None)
            if v:
                return int(v)
    except Exception:
        pass
    return 64 * 1024 * 1024


def _vmem_estimate(tm, tf, E, out_itemsize):
    """Double-buffered working-set estimate for one grid step (bytes)."""
    x_buf = 2 * tm * E * 2                       # bf16 row tile, double-buffered
    out_buf = 2 * tm * E * out_itemsize          # output tile, double-buffered
    w_buf = 2 * (E * tf * 2) + 2 * (tf * E * 2)  # W1 + W2 slices (bf16), double-buffered
    vec_buf = 2 * (tf * 4) + 2 * 3 * (E * 4)     # b1 slice + b2/gamma/beta
    acc = tm * E * 4                             # f32 accumulator scratch
    return x_buf + out_buf + w_buf + vec_buf + acc


def _choose_tiles(M, F, E, out_itemsize, tm_target, tf_target, budget):
    # Row tile: aim for >=2 tiles when M >= 32 (v7x has 2 TCs and the M axis is
    # "parallel"), and pick tm to minimize padding for awkward M.
    if M < 32:
        tm = _round_up(max(M, 8), 16)
    else:
        n_tiles = max(2, _cdiv(M, tm_target))
        tm = _round_up(_cdiv(M, n_tiles), 16)
    # Hidden tile: full F when it fits, otherwise a lane-aligned multiple of 128.
    if F <= tf_target:
        tf = F
    else:
        tf = max(128, (tf_target // 128) * 128)
    # Shrink until the working set fits the VMEM budget (tf first, then tm).
    while _vmem_estimate(tm, tf, E, out_itemsize) > budget:
        if tf > 128:
            tf = max(128, ((tf // 2) // 128) * 128)
        elif tm > 64:
            tm = max(64, _round_up(tm // 2, 16))
        else:
            break
    return tm, tf


def feedforward(x, w1, b1, w2, b2, gamma, beta, *, tm_target=512, tf_target=1024):
    """x: [B, S, E] -> [B, S, E]"""
    B, S, E = x.shape
    F = w1.shape[1]
    M = B * S
    out_dtype = x.dtype
    out_itemsize = jnp.dtype(out_dtype).itemsize

    cap = _vmem_capacity_bytes()
    budget = int(cap * 0.8)

    tm, tf = _choose_tiles(M, F, E, out_itemsize, tm_target, tf_target, budget)
    M_pad = _round_up(M, tm)
    F_pad = _round_up(F, tf)

    # x stored bf16: halves HBM read + resident VMEM; residual re-upcast in-kernel.
    x2d = x.reshape(M, E).astype(jnp.bfloat16)
    if M_pad != M:
        x2d = jnp.pad(x2d, ((0, M_pad - M), (0, 0)))

    # bf16 MXU operands; small bias/affine params kept in f32.
    w1c = w1.astype(jnp.bfloat16)
    w2c = w2.astype(jnp.bfloat16)
    b1c = b1.reshape(1, F).astype(jnp.float32)
    if F_pad != F:
        w1c = jnp.pad(w1c, ((0, 0), (0, F_pad - F)))
        b1c = jnp.pad(b1c, ((0, 0), (0, F_pad - F)))
        w2c = jnp.pad(w2c, ((0, F_pad - F), (0, 0)))
    b2c = b2.reshape(1, E).astype(jnp.float32)
    gammac = gamma.reshape(1, E).astype(jnp.float32)
    betac = beta.reshape(1, E).astype(jnp.float32)

    grid = (M_pad // tm, F_pad // tf)
    n_row_tiles = grid[0]

    cost = pl.CostEstimate(
        flops=int(4 * M_pad * E * F_pad + 10 * M_pad * E),
        transcendentals=int(M_pad * F_pad),
        bytes_accessed=int(
            x2d.size * x2d.dtype.itemsize                              # x read once
            + n_row_tiles * (w1c.size * 2 + w2c.size * 2 + b1c.size * 4)  # weights re-streamed per row tile
            + (b2c.size + gammac.size + betac.size) * 4
            + M_pad * E * out_itemsize),                               # output writeback
    )

    out2d = pl.pallas_call(
        _ff_kernel,
        out_shape=jax.ShapeDtypeStruct((M_pad, E), out_dtype),
        grid_spec=pltpu.PrefetchScalarGridSpec(
            num_scalar_prefetch=0,
            grid=grid,
            in_specs=[
                pl.BlockSpec((tm, E), lambda i, k: (i, 0)),   # x rows (resident across F steps)
                pl.BlockSpec((E, tf), lambda i, k: (0, k)),   # W1 F-slice (streamed)
                pl.BlockSpec((1, tf), lambda i, k: (0, k)),   # b1 F-slice
                pl.BlockSpec((tf, E), lambda i, k: (k, 0)),   # W2 F-slice (streamed)
                pl.BlockSpec((1, E), lambda i, k: (0, 0)),    # b2
                pl.BlockSpec((1, E), lambda i, k: (0, 0)),    # gamma
                pl.BlockSpec((1, E), lambda i, k: (0, 0)),    # beta
            ],
            out_specs=pl.BlockSpec((tm, E), lambda i, k: (i, 0)),
            scratch_shapes=[pltpu.VMEM((tm, E), jnp.float32)],
        ),
        compiler_params=pltpu.CompilerParams(
            dimension_semantics=("parallel", "arbitrary"),
            vmem_limit_bytes=budget,
        ),
        cost_estimate=cost,
    )(x2d, w1c, b1c, w2c, b2c, gammac, betac)

    if M_pad != M:
        out2d = out2d[:M]
    return out2d.reshape(B, S, E)


def _reference_matched(x, w1, b1, w2, b2, gamma, beta):
    """Mirrors the kernel numerics: bf16 x/weights on the MXU, f32 accumulation,
    bf16-stored x in the residual, f32 LayerNorm."""
    xb = x.astype(jnp.bfloat16)
    w1b = w1.astype(jnp.bfloat16)
    w2b = w2.astype(jnp.bfloat16)
    h = jnp.dot(xb, w1b, preferred_element_type=jnp.float32) + b1
    h = 0.5 * h * (1.0 + jax.lax.erf(h * _INV_SQRT2))
    y = jnp.dot(h.astype(jnp.bfloat16), w2b, preferred_element_type=jnp.float32) + b2
    y = y + xb.astype(jnp.float32)
    mean = jnp.mean(y, axis=-1, keepdims=True)
    var = jnp.mean((y - mean) ** 2, axis=-1, keepdims=True)
    return (y - mean) * jax.lax.rsqrt(var + _LN_EPS) * gamma + beta


def _reference_f32(x, w1, b1, w2, b2, gamma, beta):
    """Pure-f32 reference of the PyTorch module (eval mode)."""
    h = jnp.dot(x, w1) + b1
    h = jax.nn.gelu(h, approximate=False)
    y = jnp.dot(h, w2) + b2
    y = y + x
    mean = jnp.mean(y, axis=-1, keepdims=True)
    var = jnp.mean((y - mean) ** 2, axis=-1, keepdims=True)
    return (y - mean) * jax.lax.rsqrt(var + _LN_EPS) * gamma + beta


if __name__ == "__main__":
    # Small shapes consistent with [batch, seq, embed]
    B, S, E, FF = 2, 64, 32, 64

    key = jax.random.PRNGKey(0)
    kx, kw1, kb1, kw2, kb2, kw3, kb3, kw4, kb4 = jax.random.split(key, 9)

    x = jax.random.normal(kx, (B, S, E), dtype=jnp.float32)

    # Deterministic parameter init (PyTorch Linear-style uniform bounds).
    bound1 = 1.0 / math.sqrt(E)
    w1 = jax.random.uniform(kw1, (E, FF), jnp.float32, -bound1, bound1)
    b1 = jax.random.uniform(kb1, (FF,), jnp.float32, -bound1, bound1)
    bound2 = 1.0 / math.sqrt(FF)
    w2 = jax.random.uniform(kw2, (FF, E), jnp.float32, -bound2, bound2)
    b2 = jax.random.uniform(kb2, (E,), jnp.float32, -bound2, bound2)
    gamma = jnp.ones((E,), jnp.float32)   # LayerNorm weight init
    beta = jnp.zeros((E,), jnp.float32)   # LayerNorm bias init

    # ---- config 1: defaults (2 parallel row tiles, single F step) ----
    out = feedforward(x, w1, b1, w2, b2, gamma, beta)
    out = jax.block_until_ready(out)
    assert out.shape == (B, S, E)

    ref = _reference_matched(x, w1, b1, w2, b2, gamma, beta)
    assert jnp.allclose(out, ref, atol=2e-3, rtol=2e-3), "mismatch vs matched reference"

    ref32 = _reference_f32(x, w1, b1, w2, b2, gamma, beta)
    assert jnp.allclose(out, ref32, atol=1e-1, rtol=0.0), "mismatch vs f32 reference"

    # ---- config 2: larger hidden dim + small tile targets to exercise the
    # multi-step F reduction (accumulator path) and a 4-tile row grid ----
    FF2 = 256
    bound3 = 1.0 / math.sqrt(E)
    w1_2 = jax.random.uniform(kw3, (E, FF2), jnp.float32, -bound3, bound3)
    b1_2 = jax.random.uniform(kb3, (FF2,), jnp.float32, -bound3, bound3)
    bound4 = 1.0 / math.sqrt(FF2)
    w2_2 = jax.random.uniform(kw4, (FF2, E), jnp.float32, -bound4, bound4)
    b2_2 = jax.random.uniform(kb4, (E,), jnp.float32, -bound4, bound4)

    out2 = feedforward(x, w1_2, b1_2, w2_2, b2_2, gamma, beta,
                       tm_target=32, tf_target=128)
    out2 = jax.block_until_ready(out2)
    ref2 = _reference_matched(x, w1_2, b1_2, w2_2, b2_2, gamma, beta)
    assert jnp.allclose(out2, ref2, atol=2e-3, rtol=2e-3), "mismatch (multi-step F)"

    print("KERNEL_OK")
</pallas_src>

<mosaic_0001>
module attributes {stable_mosaic.version = 11 : i64} {
  func.func @_ff_kernel(%arg0: i32, %arg1: i32, %arg2: memref<64x32xbf16, #tpu.memory_space<vmem>>, %arg3: memref<32x64xbf16, #tpu.memory_space<vmem>>, %arg4: memref<1x64xf32, #tpu.memory_space<vmem>>, %arg5: memref<64x32xbf16, #tpu.memory_space<vmem>>, %arg6: memref<1x32xf32, #tpu.memory_space<vmem>>, %arg7: memref<1x32xf32, #tpu.memory_space<vmem>>, %arg8: memref<1x32xf32, #tpu.memory_space<vmem>>, %arg9: memref<64x32xf32, #tpu.memory_space<vmem>>, %arg10: memref<64x32xf32, #tpu.memory_space<vmem>>) attributes {dimension_semantics = [#tpu.dimension_semantics<parallel>, #tpu.dimension_semantics<arbitrary>], iteration_bounds = array<i64: 2, 1>, scalar_prefetch = 0 : i64, scratch_operands = 1 : i64, tpu.core_type = #tpu.core_type<tc>, window_params = [{transform_indices = @transform_0, window_bounds = array<i64: 64, 32>}, {transform_indices = @transform_1, window_bounds = array<i64: 32, 64>}, {transform_indices = @transform_2, window_bounds = array<i64: 1, 64>}, {transform_indices = @transform_3, window_bounds = array<i64: 64, 32>}, {pipeline_mode = #tpu.pipeline_mode<synchronous>, transform_indices = @transform_4, window_bounds = array<i64: 1, 32>}, {pipeline_mode = #tpu.pipeline_mode<synchronous>, transform_indices = @transform_5, window_bounds = array<i64: 1, 32>}, {pipeline_mode = #tpu.pipeline_mode<synchronous>, transform_indices = @transform_6, window_bounds = array<i64: 1, 32>}, {transform_indices = @transform_7, window_bounds = array<i64: 64, 32>}]} {
    %c0_i32 = arith.constant 0 : i32
    %0 = arith.cmpi eq, %arg1, %c0_i32 : i32
    %1 = arith.extui %0 : i1 to i32
    %c0_i32_0 = arith.constant 0 : i32
    %2 = arith.cmpi ne, %1, %c0_i32_0 : i32
    scf.if %2 {
      %cst_18 = arith.constant 0.000000e+00 : f32
      %26 = vector.broadcast %cst_18 : f32 to vector<64x32xf32>
      %c0_19 = arith.constant 0 : index
      %c0_20 = arith.constant 0 : index
      %27 = vector.load %arg10[%c0_19, %c0_20] : memref<64x32xf32, #tpu.memory_space<vmem>>, vector<64x32xf32>
      tpu.vector_store %arg10[%c0_19, %c0_20], %26 {strides = array<i32>} : memref<64x32xf32, #tpu.memory_space<vmem>>, vector<64x32xf32>,
    } else {
    }
    %c0 = arith.constant 0 : index
    %c0_1 = arith.constant 0 : index
    %3 = vector.load %arg2[%c0, %c0_1] : memref<64x32xbf16, #tpu.memory_space<vmem>>, vector<64x32xbf16>
    %c0_2 = arith.constant 0 : index
    %c0_3 = arith.constant 0 : index
    %4 = vector.load %arg3[%c0_2, %c0_3] : memref<32x64xbf16, #tpu.memory_space<vmem>>, vector<32x64xbf16>
    %cst = arith.constant dense<0.000000e+00> : vector<64x64xf32>
    %5 = tpu.matmul %3, %4, %cst {dimension_numbers = #tpu.dot_dimension_numbers<[1], [0], [0], [1], [0, 0, 1, 1], [], []>} : vector<64x32xbf16>, vector<32x64xbf16>, vector<64x64xf32> -> vector<64x64xf32>
    %c0_4 = arith.constant 0 : index
    %c0_5 = arith.constant 0 : index
    %6 = vector.load %arg4[%c0_4, %c0_5] : memref<1x64xf32, #tpu.memory_space<vmem>>, vector<1x64xf32>
    %7 = vector.broadcast %6 : vector<1x64xf32> to vector<64x64xf32>
    %8 = arith.addf %5, %7 : vector<64x64xf32>
    %cst_6 = arith.constant 5.000000e-01 : f32
    %9 = vector.broadcast %cst_6 : f32 to vector<64x64xf32>
    %10 = arith.mulf %9, %8 : vector<64x64xf32>
    %cst_7 = arith.constant 0.707106769 : f32
    %11 = vector.broadcast %cst_7 : f32 to vector<64x64xf32>
    %12 = arith.mulf %8, %11 : vector<64x64xf32>
    %13 = math.erf %12 : vector<64x64xf32>
    %cst_8 = arith.constant 1.000000e+00 : f32
    %14 = vector.broadcast %cst_8 : f32 to vector<64x64xf32>
    %15 = arith.addf %14, %13 : vector<64x64xf32>
    %16 = arith.mulf %10, %15 : vector<64x64xf32>
    %c0_9 = arith.constant 0 : index
    %c0_10 = arith.constant 0 : index
    %17 = vector.load %arg10[%c0_9, %c0_10] : memref<64x32xf32, #tpu.memory_space<vmem>>, vector<64x32xf32>
    %18 = arith.truncf %16 : vector<64x64xf32> to vector<64x64xbf16>
    %c0_11 = arith.constant 0 : index
    %c0_12 = arith.constant 0 : index
    %19 = vector.load %arg5[%c0_11, %c0_12] : memref<64x32xbf16, #tpu.memory_space<vmem>>, vector<64x32xbf16>
    %cst_13 = arith.constant dense<0.000000e+00> : vector<64x32xf32>
    %20 = tpu.matmul %18, %19, %cst_13 {dimension_numbers = #tpu.dot_dimension_numbers<[1], [0], [0], [1], [0, 0, 1, 1], [], []>} : vector<64x64xbf16>, vector<64x32xbf16>, vector<64x32xf32> -> vector<64x32xf32>
    %21 = arith.addf %17, %20 : vector<64x32xf32>
    %c0_14 = arith.constant 0 : index
    %c0_15 = arith.constant 0 : index
    %22 = vector.load %arg10[%c0_14, %c0_15] : memref<64x32xf32, #tpu.memory_space<vmem>>, vector<64x32xf32>
    tpu.vector_store %arg10[%c0_14, %c0_15], %21 {strides = array<i32>} : memref<64x32xf32, #tpu.memory_space<vmem>>, vector<64x32xf32>,
    %c0_i32_16 = arith.constant 0 : i32
    %23 = arith.cmpi eq, %arg1, %c0_i32_16 : i32
    %24 = arith.extui %23 : i1 to i32
    %c0_i32_17 = arith.constant 0 : i32
    %25 = arith.cmpi ne, %24, %c0_i32_17 : i32
    scf.if %25 {
      %c0_18 = arith.constant 0 : index
      %c0_19 = arith.constant 0 : index
      %26 = vector.load %arg10[%c0_18, %c0_19] : memref<64x32xf32, #tpu.memory_space<vmem>>, vector<64x32xf32>
      %c0_20 = arith.constant 0 : index
      %c0_21 = arith.constant 0 : index
      %27 = vector.load %arg6[%c0_20, %c0_21] : memref<1x32xf32, #tpu.memory_space<vmem>>, vector<1x32xf32>
      %28 = vector.broadcast %27 : vector<1x32xf32> to vector<64x32xf32>
      %29 = arith.addf %26, %28 : vector<64x32xf32>
      %c0_22 = arith.constant 0 : index
      %c0_23 = arith.constant 0 : index
      %30 = vector.load %arg2[%c0_22, %c0_23] : memref<64x32xbf16, #tpu.memory_space<vmem>>, vector<64x32xbf16>
      %31 = arith.extf %30 : vector<64x32xbf16> to vector<64x32xf32>
      %32 = arith.addf %29, %31 : vector<64x32xf32>
      %cst_24 = arith.constant dense<0.000000e+00> : vector<64xf32>
      %33 = vector.multi_reduction <add>, %32, %cst_24 [1] : vector<64x32xf32> to vector<64xf32>
      %34 = vector.shape_cast %33 : vector<64xf32> to vector<64x1xf32>
      %cst_25 = arith.constant 3.200000e+01 : f32
      %35 = vector.broadcast %cst_25 : f32 to vector<64x1xf32>
      %36 = arith.divf %34, %35 : vector<64x1xf32>
      %37 = vector.broadcast %36 : vector<64x1xf32> to vector<64x32xf32>
      %38 = arith.subf %32, %37 : vector<64x32xf32>
      %39 = arith.mulf %38, %38 : vector<64x32xf32>
      %cst_26 = arith.constant dense<0.000000e+00> : vector<64xf32>
      %40 = vector.multi_reduction <add>, %39, %cst_26 [1] : vector<64x32xf32> to vector<64xf32>
      %41 = vector.shape_cast %40 : vector<64xf32> to vector<64x1xf32>
      %cst_27 = arith.constant 3.200000e+01 : f32
      %42 = vector.broadcast %cst_27 : f32 to vector<64x1xf32>
      %43 = arith.divf %41, %42 : vector<64x1xf32>
      %44 = vector.broadcast %36 : vector<64x1xf32> to vector<64x32xf32>
      %45 = arith.subf %32, %44 : vector<64x32xf32>
      %cst_28 = arith.constant 9.99999974E-6 : f32
      %46 = vector.broadcast %cst_28 : f32 to vector<64x1xf32>
      %47 = arith.addf %43, %46 : vector<64x1xf32>
      %48 = math.rsqrt %47 : vector<64x1xf32>
      %49 = vector.broadcast %48 : vector<64x1xf32> to vector<64x32xf32>
      %50 = arith.mulf %45, %49 : vector<64x32xf32>
      %c0_29 = arith.constant 0 : index
      %c0_30 = arith.constant 0 : index
      %51 = vector.load %arg7[%c0_29, %c0_30] : memref<1x32xf32, #tpu.memory_space<vmem>>, vector<1x32xf32>
      %52 = vector.broadcast %51 : vector<1x32xf32> to vector<64x32xf32>
      %53 = arith.mulf %50, %52 : vector<64x32xf32>
      %c0_31 = arith.constant 0 : index
      %c0_32 = arith.constant 0 : index
      %54 = vector.load %arg8[%c0_31, %c0_32] : memref<1x32xf32, #tpu.memory_space<vmem>>, vector<1x32xf32>
      %55 = vector.broadcast %54 : vector<1x32xf32> to vector<64x32xf32>
      %56 = arith.addf %53, %55 : vector<64x32xf32>
      %c0_33 = arith.constant 0 : index
      %c0_34 = arith.constant 0 : index
      %57 = vector.load %arg9[%c0_33, %c0_34] : memref<64x32xf32, #tpu.memory_space<vmem>>, vector<64x32xf32>
      tpu.vector_store %arg9[%c0_33, %c0_34], %56 {strides = array<i32>} : memref<64x32xf32, #tpu.memory_space<vmem>>, vector<64x32xf32>,
    } else {
    }
    return
  }
  func.func @transform_0(%arg0: i32, %arg1: i32) -> (i32, i32) {
    %c0_i32 = arith.constant 0 : i32
    %c0_i32_0 = arith.constant 0 : i32
    return %arg0, %c0_i32 : i32, i32
  }
  func.func @transform_1(%arg0: i32, %arg1: i32) -> (i32, i32) {
    %c0_i32 = arith.constant 0 : i32
    %c0_i32_0 = arith.constant 0 : i32
    return %c0_i32, %arg1 : i32, i32
  }
  func.func @transform_2(%arg0: i32, %arg1: i32) -> (i32, i32) {
    %c0_i32 = arith.constant 0 : i32
    %c0_i32_0 = arith.constant 0 : i32
    return %c0_i32, %arg1 : i32, i32
  }
  func.func @transform_3(%arg0: i32, %arg1: i32) -> (i32, i32) {
    %c0_i32 = arith.constant 0 : i32
    %c0_i32_0 = arith.constant 0 : i32
    return %arg1, %c0_i32 : i32, i32
  }
  func.func @transform_4(%arg0: i32, %arg1: i32) -> (i32, i32) {
    %c0_i32 = arith.constant 0 : i32
    %c0_i32_0 = arith.constant 0 : i32
    %c0_i32_1 = arith.constant 0 : i32
    return %c0_i32, %c0_i32_0 : i32, i32
  }
  func.func @transform_5(%arg0: i32, %arg1: i32) -> (i32, i32) {
    %c0_i32 = arith.constant 0 : i32
    %c0_i32_0 = arith.constant 0 : i32
    %c0_i32_1 = arith.constant 0 : i32
    return %c0_i32, %c0_i32_0 : i32, i32
  }
  func.func @transform_6(%arg0: i32, %arg1: i32) -> (i32, i32) {
    %c0_i32 = arith.constant 0 : i32
    %c0_i32_0 = arith.constant 0 : i32
    %c0_i32_1 = arith.constant 0 : i32
    return %c0_i32, %c0_i32_0 : i32, i32
  }
  func.func @transform_7(%arg0: i32, %arg1: i32) -> (i32, i32) {
    %c0_i32 = arith.constant 0 : i32
    %c0_i32_0 = arith.constant 0 : i32
    return %arg0, %c0_i32 : i32, i32
  }
}

</mosaic_0001>

<llo_original>
// kernel: tpu_custom_call.1
$region0: #{tpu_custom_call.1}
  #allocation0 [shape = 'u32[]', space=smem, size = 0x4, offset = 0x4, fixed_abs, tag = 'smem constant byte address 0x4 - core index']
  #allocation1 [shape = 'u32[72,128]{1,0:T(1,128)}', space=vmem, size = 0x9000, scoped, tag = 'internal scratch']
  #allocation2 [shape = 'f32[64,32]{1,0:T(8,128)}', space=vmem, size = 0x8000, scoped, tag = 'scratch operand']
  %s0 = inlined_call_operand.vmem [shape: bf16[128,32], index: 0, kind: input, shape index: {}]
  %s1 = inlined_call_operand.vmem [shape: bf16[32,64], index: 1, kind: input, shape index: {}]
  %s2 = inlined_call_operand.vmem [shape: f32[1,64], index: 2, kind: input, shape index: {}]
  %s3 = inlined_call_operand.vmem [shape: bf16[64,32], index: 3, kind: input, shape index: {}]
  %s4 = inlined_call_operand.vmem [shape: f32[1,32], index: 4, kind: input, shape index: {}]
  %s5 = inlined_call_operand.vmem [shape: f32[1,32], index: 5, kind: input, shape index: {}]
  %s6 = inlined_call_operand.vmem [shape: f32[1,32], index: 6, kind: input, shape index: {}]
  %s7 = inlined_call_operand.vmem [shape: f32[128,32], index: 7, kind: output, shape index: {}]
  %s8 = sld [smem:[#allocation0]]
  $region69: #{tpu_custom_call.1} parent=0
    _
  %s10 = ssub.s32 1, %s8
  %s11 = scalar_select 0, %s10, %s8
  loop: start=0, step=1, limit=4
  $region2: #{tpu_custom_call.1} parent=0 // loop_pre_header
    _
  $region3: #{tpu_custom_call.1} parent=0 // loop_header
    %s13 = sphi 0, %s17
    %p14 = scmp.ge.s32.totalorder %s13, 4
    %s20 = sphi 0, %s32
    %s21 = sphi 0, %s28
    %s22 = sphi 0, %s20
    %s23 = sphi 0, %s21
    %s24 = sphi 0, %s22
    %s25 = sphi 0, %s23
    %s35 = sphi 0, %s37
    %s38 = sphi 0, %s35
    %s39 = sphi 0, %s38
    %s55 = sphi 0, %s39
    %s61 = sphi 0, %s63
    %s64 = sphi 0, %s61
    %s65 = sphi 0, %s64
    %s81 = sphi 0, %s65
    %s87 = sphi 0, %s89
    %s90 = sphi 0, %s87
    %s91 = sphi 0, %s90
    %s107 = sphi 0, %s91
    %s113 = sphi 0, %s115
    %s116 = sphi 0, %s113
    %s117 = sphi 0, %s116
    %s133 = sphi 0, %s117
    %s137 = sphi 0, %s137
    %s139 = sphi 0, %s137
    %s140 = sphi 0, %s139
    %s154 = sphi 0, %s140
    %s158 = sphi 0, %s158
    %s160 = sphi 0, %s158
    %s161 = sphi 0, %s160
    %s175 = sphi 0, %s161
    %s179 = sphi 0, %s179
    %s181 = sphi 0, %s179
    %s182 = sphi 0, %s181
    %s196 = sphi 0, %s182
    %s202 = sphi 0, %s204
    %s205 = sphi 0, %s202
    %s206 = sphi 0, %s205
    %s222 = sphi 0, %s206
  $region4: #{tpu_custom_call.1} parent=0 // loop_header_branch
    %16 = sbr.rel (%p14) target = $region8
  $region5: #{tpu_custom_call.1} parent=0 // loop_body
    %s18 = ssub.s32 %s13, 1
    %s19 = ssub.s32 %s13, 2
    %s26 = sadd.s32 1, %s21
    %p27 = scmp.ge.s32.totalorder %s26, 1
    %s28 = scalar_select %p27, 0, %s26
    %s29 = sadd.s32 1, %s20
    %s30 = scalar_select %p27, %s29, %s20
    %p31 = scmp.ge.s32.totalorder %s30, 2
    %s32 = scalar_select %p31, 0, %s30
    %s33 = ssub.s32 %s20, %s32
    %p34 = scmp.eq.s32.totalorder %s33, 0
    %s36 = sadd.s32 %s35, 1
    %s37 = scalar_select %p34, %s35, %s36
    %p40 = pneg %p34
    %p41 = scmp.eq.s32.totalorder %s13, 1
    %p42 = por %p40, %p41
    %p43 = scmp.ne.s32.totalorder %s35, %s38
    %p44 = scmp.eq.s32.totalorder %s13, 0
    %p45 = por %p43, %p44
    %p46 = scmp.ne.s32.totalorder %s35, %s38
    %p47 = scmp.eq.s32.totalorder %s18, 1
    %p48 = por %p46, %p47
    %p49 = scmp.ne.s32.totalorder %s38, %s39
    %p50 = scmp.eq.s32.totalorder %s18, 0
    %p51 = por %p49, %p50
    %p52 = scmp.ne.s32.totalorder %s38, %s39
    %p53 = scmp.eq.s32.totalorder %s19, 1
    %p54 = por %p52, %p53
    %p56 = scmp.ne.s32.totalorder %s39, %s55
    %p57 = scmp.eq.s32.totalorder %s19, 0
    %p58 = por %p56, %p57
    %s59 = ssub.s32 %s21, %s28
    %p60 = scmp.eq.s32.totalorder %s59, 0
    %s62 = sadd.s32 %s61, 1
    %s63 = scalar_select %p60, %s61, %s62
    %p66 = pneg %p60
    %p67 = scmp.eq.s32.totalorder %s13, 1
    %p68 = por %p66, %p67
    %p69 = scmp.ne.s32.totalorder %s61, %s64
    %p70 = scmp.eq.s32.totalorder %s13, 0
    %p71 = por %p69, %p70
    %p72 = scmp.ne.s32.totalorder %s61, %s64
    %p73 = scmp.eq.s32.totalorder %s18, 1
    %p74 = por %p72, %p73
    %p75 = scmp.ne.s32.totalorder %s64, %s65
    %p76 = scmp.eq.s32.totalorder %s18, 0
    %p77 = por %p75, %p76
    %p78 = scmp.ne.s32.totalorder %s64, %s65
    %p79 = scmp.eq.s32.totalorder %s19, 1
    %p80 = por %p78, %p79
    %p82 = scmp.ne.s32.totalorder %s65, %s81
    %p83 = scmp.eq.s32.totalorder %s19, 0
    %p84 = por %p82, %p83
    %s85 = ssub.s32 %s21, %s28
    %p86 = scmp.eq.s32.totalorder %s85, 0
    %s88 = sadd.s32 %s87, 1
    %s89 = scalar_select %p86, %s87, %s88
    %p92 = pneg %p86
    %p93 = scmp.eq.s32.totalorder %s13, 1
    %p94 = por %p92, %p93
    %p95 = scmp.ne.s32.totalorder %s87, %s90
    %p96 = scmp.eq.s32.totalorder %s13, 0
    %p97 = por %p95, %p96
    %p98 = scmp.ne.s32.totalorder %s87, %s90
    %p99 = scmp.eq.s32.totalorder %s18, 1
    %p100 = por %p98, %p99
    %p101 = scmp.ne.s32.totalorder %s90, %s91
    %p102 = scmp.eq.s32.totalorder %s18, 0
    %p103 = por %p101, %p102
    %p104 = scmp.ne.s32.totalorder %s90, %s91
    %p105 = scmp.eq.s32.totalorder %s19, 1
    %p106 = por %p104, %p105
    %p108 = scmp.ne.s32.totalorder %s91, %s107
    %p109 = scmp.eq.s32.totalorder %s19, 0
    %p110 = por %p108, %p109
    %s111 = ssub.s32 %s21, %s28
    %p112 = scmp.eq.s32.totalorder %s111, 0
    %s114 = sadd.s32 %s113, 1
    %s115 = scalar_select %p112, %s113, %s114
    %p118 = pneg %p112
    %p119 = scmp.eq.s32.totalorder %s13, 1
    %p120 = por %p118, %p119
    %p121 = scmp.ne.s32.totalorder %s113, %s116
    %p122 = scmp.eq.s32.totalorder %s13, 0
    %p123 = por %p121, %p122
    %p124 = scmp.ne.s32.totalorder %s113, %s116
    %p125 = scmp.eq.s32.totalorder %s18, 1
    %p126 = por %p124, %p125
    %p127 = scmp.ne.s32.totalorder %s116, %s117
    %p128 = scmp.eq.s32.totalorder %s18, 0
    %p129 = por %p127, %p128
    %p130 = scmp.ne.s32.totalorder %s116, %s117
    %p131 = scmp.eq.s32.totalorder %s19, 1
    %p132 = por %p130, %p131
    %p134 = scmp.ne.s32.totalorder %s117, %s133
    %p135 = scmp.eq.s32.totalorder %s19, 0
    %p136 = por %p134, %p135
    %s138 = sadd.s32 %s137, 1
    %p141 = scmp.eq.s32.totalorder %s13, 1
    %p142 = scmp.ne.s32.totalorder %s137, %s139
    %p143 = scmp.eq.s32.totalorder %s13, 0
    %p144 = por %p142, %p143
    %p145 = scmp.ne.s32.totalorder %s137, %s139
    %p146 = scmp.eq.s32.totalorder %s18, 1
    %p147 = por %p145, %p146
    %p148 = scmp.ne.s32.totalorder %s139, %s140
    %p149 = scmp.eq.s32.totalorder %s18, 0
    %p150 = por %p148, %p149
    %p151 = scmp.ne.s32.totalorder %s139, %s140
    %p152 = scmp.eq.s32.totalorder %s19, 1
    %p153 = por %p151, %p152
    %p155 = scmp.ne.s32.totalorder %s140, %s154
    %p156 = scmp.eq.s32.totalorder %s19, 0
    %p157 = por %p155, %p156
    %s159 = sadd.s32 %s158, 1
    %p162 = scmp.eq.s32.totalorder %s13, 1
    %p163 = scmp.ne.s32.totalorder %s158, %s160
    %p164 = scmp.eq.s32.totalorder %s13, 0
    %p165 = por %p163, %p164
    %p166 = scmp.ne.s32.totalorder %s158, %s160
    %p167 = scmp.eq.s32.totalorder %s18, 1
    %p168 = por %p166, %p167
    %p169 = scmp.ne.s32.totalorder %s160, %s161
    %p170 = scmp.eq.s32.totalorder %s18, 0
    %p171 = por %p169, %p170
    %p172 = scmp.ne.s32.totalorder %s160, %s161
    %p173 = scmp.eq.s32.totalorder %s19, 1
    %p174 = por %p172, %p173
    %p176 = scmp.ne.s32.totalorder %s161, %s175
    %p177 = scmp.eq.s32.totalorder %s19, 0
    %p178 = por %p176, %p177
    %s180 = sadd.s32 %s179, 1
    %p183 = scmp.eq.s32.totalorder %s13, 1
    %p184 = scmp.ne.s32.totalorder %s179, %s181
    %p185 = scmp.eq.s32.totalorder %s13, 0
    %p186 = por %p184, %p185
    %p187 = scmp.ne.s32.totalorder %s179, %s181
    %p188 = scmp.eq.s32.totalorder %s18, 1
    %p189 = por %p187, %p188
    %p190 = scmp.ne.s32.totalorder %s181, %s182
    %p191 = scmp.eq.s32.totalorder %s18, 0
    %p192 = por %p190, %p191
    %p193 = scmp.ne.s32.totalorder %s181, %s182
    %p194 = scmp.eq.s32.totalorder %s19, 1
    %p195 = por %p193, %p194
    %p197 = scmp.ne.s32.totalorder %s182, %s196
    %p198 = scmp.eq.s32.totalorder %s19, 0
    %p199 = por %p197, %p198
    %s200 = ssub.s32 %s20, %s32
    %p201 = scmp.eq.s32.totalorder %s200, 0
    %s203 = sadd.s32 %s202, 1
    %s204 = scalar_select %p201, %s202, %s203
    %p207 = pneg %p201
    %p208 = scmp.eq.s32.totalorder %s13, 1
    %p209 = por %p207, %p208
    %p210 = scmp.ne.s32.totalorder %s202, %s205
    %p211 = scmp.eq.s32.totalorder %s13, 0
    %p212 = por %p210, %p211
    %p213 = scmp.ne.s32.totalorder %s202, %s205
    %p214 = scmp.eq.s32.totalorder %s18, 1
    %p215 = por %p213, %p214
    %p216 = scmp.ne.s32.totalorder %s205, %s206
    %p217 = scmp.eq.s32.totalorder %s18, 0
    %p218 = por %p216, %p217
    %p219 = scmp.ne.s32.totalorder %s205, %s206
    %p220 = scmp.eq.s32.totalorder %s19, 1
    %p221 = por %p219, %p220
    %p223 = scmp.ne.s32.totalorder %s206, %s222
    %p224 = scmp.eq.s32.totalorder %s19, 0
    %p225 = por %p223, %p224
    %p226 = scmp.le.s32.totalorder 1, %s13
    %p227 = scmp.lt.s32.totalorder %s13, 3
    %p228 = pnand %p226, %p227
    %p229 = pneg %p228
    // Predicated region
    $region9: #{tpu_custom_call.1} parent=5 // pred_check
      _
    $region10: #{tpu_custom_call.1} parent=5 // pred_check_branch
      %231 = sbr.rel (%p228) target = $region12
    $region11: #{tpu_custom_call.1} parent=5 // pred_region
      %s232 = ssub.s32 %s13, 1
      // Predicated region
      $region13: #{tpu_custom_call.1} parent=11 // pred_check
        %p233 = pneg %p77
      $region14: #{tpu_custom_call.1} parent=11 // pred_check_branch
        %235 = sbr.rel (%p233) target = $region16
      $region15: #{tpu_custom_call.1} parent=11 // pred_region
        %p236 = scmp.lt.s32.totalorder %s23, 0
        %s237 = scalar_select %p236, %s23, 0
        %s238 = smul.addr %s237, 4
        %s239 = scalar_lea.vmem %s1, %s238
      $region16: #{tpu_custom_call.1} parent=11 // pred_fallthru
        _
      // Predicated region
      $region17: #{tpu_custom_call.1} parent=11 // pred_check
        %p240 = pneg %p103
      $region18: #{tpu_custom_call.1} parent=11 // pred_check_branch
        %242 = sbr.rel (%p240) target = $region20
      $region19: #{tpu_custom_call.1} parent=11 // pred_region
        %p243 = scmp.lt.s32.totalorder %s23, 0
        %s244 = scalar_select %p243, %s23, 0
        %s245 = scalar_lea.vmem %s2, %s244
      $region20: #{tpu_custom_call.1} parent=11 // pred_fallthru
        _
      // Predicated region
      $region21: #{tpu_custom_call.1} parent=11 // pred_check
        %p246 = pneg %p129
      $region22: #{tpu_custom_call.1} parent=11 // pred_check_branch
        %248 = sbr.rel (%p246) target = $region24
      $region23: #{tpu_custom_call.1} parent=11 // pred_region
        %s249 = smul.u32 8, %s23
        %p250 = scmp.lt.s32.totalorder %s249, 7
        %s251 = scalar_select %p250, %s249, 7
        %s252 = smul.addr %s251, 4
        %s253 = scalar_lea.vmem %s3, %s252
        %s254 = smul.u32 8, %s23
      $region24: #{tpu_custom_call.1} parent=11 // pred_fallthru
        _
      // Predicated region
      $region25: #{tpu_custom_call.1} parent=11 // pred_check
        %p255 = pneg %p150
      $region26: #{tpu_custom_call.1} parent=11 // pred_check_branch
        %257 = sbr.rel (%p255) target = $region28
      $region27: #{tpu_custom_call.1} parent=11 // pred_region
        _
      $region28: #{tpu_custom_call.1} parent=11 // pred_fallthru
        _
      // Predicated region
      $region29: #{tpu_custom_call.1} parent=11 // pred_check
        %p258 = pneg %p171
      $region30: #{tpu_custom_call.1} parent=11 // pred_check_branch
        %260 = sbr.rel (%p258) target = $region32
      $region31: #{tpu_custom_call.1} parent=11 // pred_region
        _
      $region32: #{tpu_custom_call.1} parent=11 // pred_fallthru
        _
      // Predicated region
      $region33: #{tpu_custom_call.1} parent=11 // pred_check
        %p261 = pneg %p192
      $region34: #{tpu_custom_call.1} parent=11 // pred_check_branch
        %263 = sbr.rel (%p261) target = $region36
      $region35: #{tpu_custom_call.1} parent=11 // pred_region
        _
      $region36: #{tpu_custom_call.1} parent=11 // pred_fallthru
        _
    $region12: #{tpu_custom_call.1} parent=5 // pred_fallthru
      _
    %p264 = scmp.lt.s32.totalorder %s13, 2
    // Predicated region
    $region37: #{tpu_custom_call.1} parent=5 // pred_check
      %p265 = pneg %p264
    $region38: #{tpu_custom_call.1} parent=5 // pred_check_branch
      %267 = sbr.rel (%p265) target = $region40
    $region39: #{tpu_custom_call.1} parent=5 // pred_region
      // Predicated region
      $region41: #{tpu_custom_call.1} parent=39 // pred_check
        %p268 = pneg %p45
      $region42: #{tpu_custom_call.1} parent=39 // pred_check_branch
        %270 = sbr.rel (%p268) target = $region44
      $region43: #{tpu_custom_call.1} parent=39 // pred_region
        %s271 = smul.u32 8, %s20
        %p272 = scmp.lt.s32.totalorder %s271, 15
        %s273 = scalar_select %p272, %s271, 15
        %s274 = smul.addr %s273, 4
        %s275 = scalar_lea.vmem %s0, %s274
        %s276 = smul.u32 8, %s20
      $region44: #{tpu_custom_call.1} parent=39 // pred_fallthru
        _
    $region40: #{tpu_custom_call.1} parent=5 // pred_fallthru
      _
    %p277 = scmp.le.s32.totalorder 1, %s13
    %p278 = scmp.lt.s32.totalorder %s13, 3
    %p279 = pnand %p277, %p278
    %p280 = pneg %p279
    // Predicated region
    $region45: #{tpu_custom_call.1} parent=5 // pred_check
      _
    $region46: #{tpu_custom_call.1} parent=5 // pred_check_branch
      %282 = sbr.rel (%p279) target = $region48
    $region47: #{tpu_custom_call.1} parent=5 // pred_region
      %s283 = ssub.s32 %s13, 1
      %s284 = smul.u32 8, %s22
      %p285 = scmp.lt.s32.totalorder %s284, 15
      %s286 = scalar_select %p285, %s284, 15
      %s287 = smul.addr %s286, 4
      %s288 = scalar_lea.vmem %s0, %s287
      %p289 = pneg %p51
      %p290 = pneg %p48
      %p291 = scmp.lt.s32.totalorder %s23, 0
      %s292 = scalar_select %p291, %s23, 0
      %s293 = smul.addr %s292, 4
      %s294 = scalar_lea.vmem %s1, %s293
      %p295 = pneg %p77
      %p296 = pneg %p74
      %p297 = scmp.lt.s32.totalorder %s23, 0
      %s298 = scalar_select %p297, %s23, 0
      %s299 = scalar_lea.vmem %s2, %s298
      %p300 = pneg %p103
      %p301 = pneg %p100
      %s302 = smul.u32 8, %s23
      %p303 = scmp.lt.s32.totalorder %s302, 7
      %s304 = scalar_select %p303, %s302, 7
      %s305 = smul.addr %s304, 4
      %s306 = scalar_lea.vmem %s3, %s305
      %p307 = pneg %p129
      %p308 = pneg %p126
      %p309 = pneg %p150
      %p310 = pneg %p147
      %p311 = pneg %p171
      %p312 = pneg %p168
      %p313 = pneg %p192
      %p314 = pneg %p189
      %p315 = pneg %p218
      %p316 = pneg %p215
      %s317 = smul.u32 8, %s22
      %p318 = scmp.lt.s32.totalorder %s317, 15
      %s319 = scalar_select %p318, %s317, 15
      %s320 = smul.addr %s319, 8
      %s321 = scalar_lea.vmem %s7, %s320
      %s322 = smul.u32 8, %s22
      %p323 = scmp.lt.s32.totalorder %s322, 15
      %s324 = scalar_select %p323, %s322, 15
      %s325 = smul.addr %s324, 4
      %s326 = scalar_lea.vmem %s0, %s325
      %s327 = smul.u32 8, %s22
      %p328 = scmp.lt.s32.totalorder %s23, 0
      %s329 = scalar_select %p328, %s23, 0
      %s330 = smul.addr %s329, 4
      %s331 = scalar_lea.vmem %s1, %s330
      %p332 = scmp.lt.s32.totalorder %s23, 0
      %s333 = scalar_select %p332, %s23, 0
      %s334 = scalar_lea.vmem %s2, %s333
      %s335 = smul.u32 8, %s23
      %p336 = scmp.lt.s32.totalorder %s335, 7
      %s337 = scalar_select %p336, %s335, 7
      %s338 = smul.addr %s337, 4
      %s339 = scalar_lea.vmem %s3, %s338
      %s340 = smul.u32 8, %s23
      %s341 = smul.u32 8, %s22
      %p342 = scmp.lt.s32.totalorder %s341, 15
      %s343 = scalar_select %p342, %s341, 15
      %s344 = smul.addr %s343, 8
      %s345 = scalar_lea.vmem %s7, %s344
      %s346 = smul.u32 8, %s22
      %p348 = scmp.eq.s32.totalorder %s23, 0
      // Predicated region
      $region49: #{tpu_custom_call.1} parent=47 // pred_check
        %p349 = pneg %p348
      $region50: #{tpu_custom_call.1} parent=47 // pred_check_branch
        %351 = sbr.rel (%p349) target = $region52
      $region51: #{tpu_custom_call.1} parent=47 // pred_region
        %vm352 = vcmask 261120
        %353 = vst.msk [vmem:[#allocation2] sm:$0xff] %vm352, 0.0
        %354 = vst.msk [vmem:[#allocation2 + $0x8] sm:$0xff] %vm352, 0.0
        %355 = vst.msk [vmem:[#allocation2 + $0x10] sm:$0xff] %vm352, 0.0
        %356 = vst.msk [vmem:[#allocation2 + $0x18] sm:$0xff] %vm352, 0.0
        %357 = vst.msk [vmem:[#allocation2 + $0x20] sm:$0xff] %vm352, 0.0
        %358 = vst.msk [vmem:[#allocation2 + $0x28] sm:$0xff] %vm352, 0.0
        %359 = vst.msk [vmem:[#allocation2 + $0x30] sm:$0xff] %vm352, 0.0
        %360 = vst.msk [vmem:[#allocation2 + $0x38] sm:$0xff] %vm352, 0.0
      $region52: #{tpu_custom_call.1} parent=47 // pred_fallthru
        _
      %v361 = vld [vmem:[%s326] sm:$0xf]
      %v362 = vld [vmem:[%s326 + $0x4] sm:$0xf]
      %v363 = vld [vmem:[%s326 + $0x8] sm:$0xf]
      %v364 = vld [vmem:[%s326 + $0xc] sm:$0xf]
      %v365 = vld [vmem:[%s326 + $0x10] sm:$0xf]
      %v366 = vld [vmem:[%s326 + $0x14] sm:$0xf]
      %v367 = vld [vmem:[%s326 + $0x18] sm:$0xf]
      %v368 = vld [vmem:[%s326 + $0x1c] sm:$0xf]
      %v369 = vld [vmem:[%s331] sm:$0xf]
      %v370 = vld [vmem:[%s331 + $0x4] sm:$0xf]
      %v371 = vld [vmem:[%s331 + $0x8] sm:$0xf]
      %v372 = vld [vmem:[%s331 + $0xc] sm:$0xf]
      %v373 = vld [vmem:[%s334] sm:$0x1]
      %v375 = vperm.slane %v373, 0
      %v385 = vunpack.c.l.b16 %v361
      %v386 = vunpack.c.l.b16 %v362
      %v387 = vunpack.c.l.b16 %v363
      %v388 = vunpack.c.l.b16 %v364
      %v389 = vunpack.c.l.b16 %v365
      %v390 = vunpack.c.l.b16 %v366
      %v391 = vunpack.c.l.b16 %v367
      %v392 = vunpack.c.l.b16 %v368
      %v393 = vpack.c.b16 %v386, %v385
      %v394 = vpack.c.b16 %v388, %v387
      %v395 = vpack.c.b16 %v390, %v389
      %v396 = vpack.c.b16 %v392, %v391
      %v401 = vunpack.c.l.b16 %v369
      %v402 = vunpack.c.l.b16 %v370
      %v403 = vunpack.c.l.b16 %v371
      %v404 = vunpack.c.l.b16 %v372
      %v405 = vpack.c.b16 %v402, %v401
      %v406 = vpack.c.b16 %v404, %v403
      %vm409 = vcmask 261120
      %v411 = vsel %vm409, %v393, 0
      %v414 = vsel %vm409, %v394, 0
      %v417 = vsel %vm409, %v395, 0
      %v420 = vsel %vm409, %v396, 0
      %422 = vmatpush.bf16.msra.mxu0 0
      %423 = vmatpush.bf16.msra.mxu0 0
      %424 = vmatpush.bf16.msra.mxu0 0
      %425 = vmatpush.bf16.msra.mxu0 0
      %426 = vmatpush.bf16.msra.mxu0 0
      %427 = vmatpush.bf16.msra.mxu0 0
      %428 = vmatpush.bf16.msra.mxu0 %v406
      %429 = vmatpush.bf16.msra.mxu0 %v405
      %430 = vmatmul.bf16.gmra.mxu0 %v411
      %v431 = vpop.f32.mrf.mxu0
      %v432 = vadd.f32 %v375, %v431
      %v433 = vpop.f32.mrf.mxu0
      %v434 = vadd.f32 %v375, %v433
      %435 = vmatmul.bf16.gmra.mxu0 %v414
      %v436 = vpop.f32.mrf.mxu0
      %v437 = vadd.f32 %v375, %v436
      %v438 = vpop.f32.mrf.mxu0
      %v439 = vadd.f32 %v375, %v438
      %440 = vmatmul.bf16.gmra.mxu0 %v417
      %v441 = vpop.f32.mrf.mxu0
      %v442 = vadd.f32 %v375, %v441
      %v443 = vpop.f32.mrf.mxu0
      %v444 = vadd.f32 %v375, %v443
      %445 = vmatmul.bf16.gmra.mxu0 %v420
      %v446 = vpop.f32.mrf.mxu0
      %v447 = vadd.f32 %v375, %v446
      %v448 = vpop.f32.mrf.mxu0
      %v449 = vadd.f32 %v375, %v448
      %450 = vdwg.mxu0
      %v451 = vmul.f32 %v432, 0.5
      %v452 = vmul.f32 %v434, 0.5
      %v453 = vmul.f32 %v437, 0.5
      %v454 = vmul.f32 %v439, 0.5
      %v455 = vmul.f32 %v442, 0.5
      %v456 = vmul.f32 %v444, 0.5
      %v457 = vmul.f32 %v447, 0.5
      %v458 = vmul.f32 %v449, 0.5
      %v459 = vmul.f32 %v432, 0.70710677
      %v460 = vmul.f32 %v434, 0.70710677
      %v461 = vmul.f32 %v437, 0.70710677
      %v462 = vmul.f32 %v439, 0.70710677
      %v463 = vmul.f32 %v442, 0.70710677
      %v464 = vmul.f32 %v444, 0.70710677
      %v465 = vmul.f32 %v447, 0.70710677
      %v466 = vmul.f32 %v449, 0.70710677
      %v467 = vmul.f32 %v459, %v459
      %v468 = vmin.f32 16.0, %v467
      %v469 = vmul.f32 %v468, 2.1237322e-06
      %v470 = vadd.f32 %v469, 0.00028619796
      %v471 = vmul.f32 %v468, %v470
      %v472 = vadd.f32 %v471, 0.0036580483
      %v473 = vmul.f32 %v468, %v472
      %v474 = vadd.f32 %v473, 0.05243302
      %v475 = vmul.f32 %v468, %v474
      %v476 = vadd.f32 %v475, 0.18741608
      %v477 = vmul.f32 %v468, %v476
      %v478 = vadd.f32 %v477, 1.1283791
      %v479 = vmul.f32 %v459, %v478
      %v480 = vmul.f32 %v468, 3.8918573e-05
      %v481 = vadd.f32 %v480, 0.001143296
      %v482 = vmul.f32 %v468, %v481
      %v483 = vadd.f32 %v482, 0.014752088
      %v484 = vmul.f32 %v468, %v483
      %v485 = vadd.f32 %v484, 0.112945676
      %v486 = vmul.f32 %v468, %v485
      %v487 = vadd.f32 %v486, 0.4994258
      %v488 = vmul.f32 %v468, %v487
      %v489 = vadd.f32 %v488, 1.0
      %v490 = vrcp.pop %v489
      %v491 = vmul.f32 %v489, %v490
      %v492 = vsub.f32 1.0, %v491
      %v493 = vmul.f32 %v490, %v492
      %v494 = vadd.f32 %v490, %v493
      %vm495 = vweird.f32 %v489
      %vm496 = vweird.f32 %v490
      %vm497 = vmor %vm495, %vm496
      %v498 = vsel %vm497, %v490, %v494
      %v499 = vand.u32 2147483647, %v489
      %vm500 = vcmp.eq.f32.partialorder %v499, 8.507059e+37
      %v501 = vand.u32 %v489, 2147483648
      %v502 = vor.u32 1.1754944e-38, %v501
      %v503 = vsel %vm500, %v502, %v498
      %v504 = vmul.f32 %v479, %v503
      %v505 = vmin.f32 %v504, 1.0
      %v506 = vmax.f32 %v505, -1.0
      %v507 = vmul.f32 %v460, %v460
      %v508 = vmin.f32 16.0, %v507
      %v509 = vmul.f32 %v508, 2.1237322e-06
      %v510 = vadd.f32 %v509, 0.00028619796
      %v511 = vmul.f32 %v508, %v510
      %v512 = vadd.f32 %v511, 0.0036580483
      %v513 = vmul.f32 %v508, %v512
      %v514 = vadd.f32 %v513, 0.05243302
      %v515 = vmul.f32 %v508, %v514
      %v516 = vadd.f32 %v515, 0.18741608
      %v517 = vmul.f32 %v508, %v516
      %v518 = vadd.f32 %v517, 1.1283791
      %v519 = vmul.f32 %v460, %v518
      %v520 = vmul.f32 %v508, 3.8918573e-05
      %v521 = vadd.f32 %v520, 0.001143296
      %v522 = vmul.f32 %v508, %v521
      %v523 = vadd.f32 %v522, 0.014752088
      %v524 = vmul.f32 %v508, %v523
      %v525 = vadd.f32 %v524, 0.112945676
      %v526 = vmul.f32 %v508, %v525
      %v527 = vadd.f32 %v526, 0.4994258
      %v528 = vmul.f32 %v508, %v527
      %v529 = vadd.f32 %v528, 1.0
      %v530 = vrcp.pop %v529
      %v531 = vmul.f32 %v529, %v530
      %v532 = vsub.f32 1.0, %v531
      %v533 = vmul.f32 %v530, %v532
      %v534 = vadd.f32 %v530, %v533
      %vm535 = vweird.f32 %v529
      %vm536 = vweird.f32 %v530
      %vm537 = vmor %vm535, %vm536
      %v538 = vsel %vm537, %v530, %v534
      %v539 = vand.u32 2147483647, %v529
      %vm540 = vcmp.eq.f32.partialorder %v539, 8.507059e+37
      %v541 = vand.u32 %v529, 2147483648
      %v542 = vor.u32 1.1754944e-38, %v541
      %v543 = vsel %vm540, %v542, %v538
      %v544 = vmul.f32 %v519, %v543
      %v545 = vmin.f32 %v544, 1.0
      %v546 = vmax.f32 %v545, -1.0
      %v547 = vmul.f32 %v461, %v461
      %v548 = vmin.f32 16.0, %v547
      %v549 = vmul.f32 %v548, 2.1237322e-06
      %v550 = vadd.f32 %v549, 0.00028619796
      %v551 = vmul.f32 %v548, %v550
      %v552 = vadd.f32 %v551, 0.0036580483
      %v553 = vmul.f32 %v548, %v552
      %v554 = vadd.f32 %v553, 0.05243302
      %v555 = vmul.f32 %v548, %v554
      %v556 = vadd.f32 %v555, 0.18741608
      %v557 = vmul.f32 %v548, %v556
      %v558 = vadd.f32 %v557, 1.1283791
      %v559 = vmul.f32 %v461, %v558
      %v560 = vmul.f32 %v548, 3.8918573e-05
      %v561 = vadd.f32 %v560, 0.001143296
      %v562 = vmul.f32 %v548, %v561
      %v563 = vadd.f32 %v562, 0.014752088
      %v564 = vmul.f32 %v548, %v563
      %v565 = vadd.f32 %v564, 0.112945676
      %v566 = vmul.f32 %v548, %v565
      %v567 = vadd.f32 %v566, 0.4994258
      %v568 = vmul.f32 %v548, %v567
      %v569 = vadd.f32 %v568, 1.0
      %v570 = vrcp.pop %v569
      %v571 = vmul.f32 %v569, %v570
      %v572 = vsub.f32 1.0, %v571
      %v573 = vmul.f32 %v570, %v572
      %v574 = vadd.f32 %v570, %v573
      %vm575 = vweird.f32 %v569
      %vm576 = vweird.f32 %v570
      %vm577 = vmor %vm575, %vm576
      %v578 = vsel %vm577, %v570, %v574
      %v579 = vand.u32 2147483647, %v569
      %vm580 = vcmp.eq.f32.partialorder %v579, 8.507059e+37
      %v581 = vand.u32 %v569, 2147483648
      %v582 = vor.u32 1.1754944e-38, %v581
      %v583 = vsel %vm580, %v582, %v578
      %v584 = vmul.f32 %v559, %v583
      %v585 = vmin.f32 %v584, 1.0
      %v586 = vmax.f32 %v585, -1.0
      %v587 = vmul.f32 %v462, %v462
      %v588 = vmin.f32 16.0, %v587
      %v589 = vmul.f32 %v588, 2.1237322e-06
      %v590 = vadd.f32 %v589, 0.00028619796
      %v591 = vmul.f32 %v588, %v590
      %v592 = vadd.f32 %v591, 0.0036580483
      %v593 = vmul.f32 %v588, %v592
      %v594 = vadd.f32 %v593, 0.05243302
      %v595 = vmul.f32 %v588, %v594
      %v596 = vadd.f32 %v595, 0.18741608
      %v597 = vmul.f32 %v588, %v596
      %v598 = vadd.f32 %v597, 1.1283791
      %v599 = vmul.f32 %v462, %v598
      %v600 = vmul.f32 %v588, 3.8918573e-05
      %v601 = vadd.f32 %v600, 0.001143296
      %v602 = vmul.f32 %v588, %v601
      %v603 = vadd.f32 %v602, 0.014752088
      %v604 = vmul.f32 %v588, %v603
      %v605 = vadd.f32 %v604, 0.112945676
      %v606 = vmul.f32 %v588, %v605
      %v607 = vadd.f32 %v606, 0.4994258
      %v608 = vmul.f32 %v588, %v607
      %v609 = vadd.f32 %v608, 1.0
      %v610 = vrcp.pop %v609
      %v611 = vmul.f32 %v609, %v610
      %v612 = vsub.f32 1.0, %v611
      %v613 = vmul.f32 %v610, %v612
      %v614 = vadd.f32 %v610, %v613
      %vm615 = vweird.f32 %v609
      %vm616 = vweird.f32 %v610
      %vm617 = vmor %vm615, %vm616
      %v618 = vsel %vm617, %v610, %v614
      %v619 = vand.u32 2147483647, %v609
      %vm620 = vcmp.eq.f32.partialorder %v619, 8.507059e+37
      %v621 = vand.u32 %v609, 2147483648
      %v622 = vor.u32 1.1754944e-38, %v621
      %v623 = vsel %vm620, %v622, %v618
      %v624 = vmul.f32 %v599, %v623
      %v625 = vmin.f32 %v624, 1.0
      %v626 = vmax.f32 %v625, -1.0
      %v627 = vmul.f32 %v463, %v463
      %v628 = vmin.f32 16.0, %v627
      %v629 = vmul.f32 %v628, 2.1237322e-06
      %v630 = vadd.f32 %v629, 0.00028619796
      %v631 = vmul.f32 %v628, %v630
      %v632 = vadd.f32 %v631, 0.0036580483
      %v633 = vmul.f32 %v628, %v632
      %v634 = vadd.f32 %v633, 0.05243302
      %v635 = vmul.f32 %v628, %v634
      %v636 = vadd.f32 %v635, 0.18741608
      %v637 = vmul.f32 %v628, %v636
      %v638 = vadd.f32 %v637, 1.1283791
      %v639 = vmul.f32 %v463, %v638
      %v640 = vmul.f32 %v628, 3.8918573e-05
      %v641 = vadd.f32 %v640, 0.001143296
      %v642 = vmul.f32 %v628, %v641
      %v643 = vadd.f32 %v642, 0.014752088
      %v644 = vmul.f32 %v628, %v643
      %v645 = vadd.f32 %v644, 0.112945676
      %v646 = vmul.f32 %v628, %v645
      %v647 = vadd.f32 %v646, 0.4994258
      %v648 = vmul.f32 %v628, %v647
      %v649 = vadd.f32 %v648, 1.0
      %v650 = vrcp.pop %v649
      %v651 = vmul.f32 %v649, %v650
      %v652 = vsub.f32 1.0, %v651
      %v653 = vmul.f32 %v650, %v652
      %v654 = vadd.f32 %v650, %v653
      %vm655 = vweird.f32 %v649
      %vm656 = vweird.f32 %v650
      %vm657 = vmor %vm655, %vm656
      %v658 = vsel %vm657, %v650, %v654
      %v659 = vand.u32 2147483647, %v649
      %vm660 = vcmp.eq.f32.partialorder %v659, 8.507059e+37
      %v661 = vand.u32 %v649, 2147483648
      %v662 = vor.u32 1.1754944e-38, %v661
      %v663 = vsel %vm660, %v662, %v658
      %v664 = vmul.f32 %v639, %v663
      %v665 = vmin.f32 %v664, 1.0
      %v666 = vmax.f32 %v665, -1.0
      %v667 = vmul.f32 %v464, %v464
      %v668 = vmin.f32 16.0, %v667
      %v669 = vmul.f32 %v668, 2.1237322e-06
      %v670 = vadd.f32 %v669, 0.00028619796
      %v671 = vmul.f32 %v668, %v670
      %v672 = vadd.f32 %v671, 0.0036580483
      %v673 = vmul.f32 %v668, %v672
      %v674 = vadd.f32 %v673, 0.05243302
      %v675 = vmul.f32 %v668, %v674
      %v676 = vadd.f32 %v675, 0.18741608
      %v677 = vmul.f32 %v668, %v676
      %v678 = vadd.f32 %v677, 1.1283791
      %v679 = vmul.f32 %v464, %v678
      %v680 = vmul.f32 %v668, 3.8918573e-05
      %v681 = vadd.f32 %v680, 0.001143296
      %v682 = vmul.f32 %v668, %v681
      %v683 = vadd.f32 %v682, 0.014752088
      %v684 = vmul.f32 %v668, %v683
      %v685 = vadd.f32 %v684, 0.112945676
      %v686 = vmul.f32 %v668, %v685
      %v687 = vadd.f32 %v686, 0.4994258
      %v688 = vmul.f32 %v668, %v687
      %v689 = vadd.f32 %v688, 1.0
      %v690 = vrcp.pop %v689
      %v691 = vmul.f32 %v689, %v690
      %v692 = vsub.f32 1.0, %v691
      %v693 = vmul.f32 %v690, %v692
      %v694 = vadd.f32 %v690, %v693
      %vm695 = vweird.f32 %v689
      %vm696 = vweird.f32 %v690
      %vm697 = vmor %vm695, %vm696
      %v698 = vsel %vm697, %v690, %v694
      %v699 = vand.u32 2147483647, %v689
      %vm700 = vcmp.eq.f32.partialorder %v699, 8.507059e+37
      %v701 = vand.u32 %v689, 2147483648
      %v702 = vor.u32 1.1754944e-38, %v701
      %v703 = vsel %vm700, %v702, %v698
      %v704 = vmul.f32 %v679, %v703
      %v705 = vmin.f32 %v704, 1.0
      %v706 = vmax.f32 %v705, -1.0
      %v707 = vmul.f32 %v465, %v465
      %v708 = vmin.f32 16.0, %v707
      %v709 = vmul.f32 %v708, 2.1237322e-06
      %v710 = vadd.f32 %v709, 0.00028619796
      %v711 = vmul.f32 %v708, %v710
      %v712 = vadd.f32 %v711, 0.0036580483
      %v713 = vmul.f32 %v708, %v712
      %v714 = vadd.f32 %v713, 0.05243302
      %v715 = vmul.f32 %v708, %v714
      %v716 = vadd.f32 %v715, 0.18741608
      %v717 = vmul.f32 %v708, %v716
      %v718 = vadd.f32 %v717, 1.1283791
      %v719 = vmul.f32 %v465, %v718
      %v720 = vmul.f32 %v708, 3.8918573e-05
      %v721 = vadd.f32 %v720, 0.001143296
      %v722 = vmul.f32 %v708, %v721
      %v723 = vadd.f32 %v722, 0.014752088
      %v724 = vmul.f32 %v708, %v723
      %v725 = vadd.f32 %v724, 0.112945676
      %v726 = vmul.f32 %v708, %v725
      %v727 = vadd.f32 %v726, 0.4994258
      %v728 = vmul.f32 %v708, %v727
      %v729 = vadd.f32 %v728, 1.0
      %v730 = vrcp.pop %v729
      %v731 = vmul.f32 %v729, %v730
      %v732 = vsub.f32 1.0, %v731
      %v733 = vmul.f32 %v730, %v732
      %v734 = vadd.f32 %v730, %v733
      %vm735 = vweird.f32 %v729
      %vm736 = vweird.f32 %v730
      %vm737 = vmor %vm735, %vm736
      %v738 = vsel %vm737, %v730, %v734
      %v739 = vand.u32 2147483647, %v729
      %vm740 = vcmp.eq.f32.partialorder %v739, 8.507059e+37
      %v741 = vand.u32 %v729, 2147483648
      %v742 = vor.u32 1.1754944e-38, %v741
      %v743 = vsel %vm740, %v742, %v738
      %v744 = vmul.f32 %v719, %v743
      %v745 = vmin.f32 %v744, 1.0
      %v746 = vmax.f32 %v745, -1.0
      %v747 = vmul.f32 %v466, %v466
      %v748 = vmin.f32 16.0, %v747
      %v749 = vmul.f32 %v748, 2.1237322e-06
      %v750 = vadd.f32 %v749, 0.00028619796
      %v751 = vmul.f32 %v748, %v750
      %v752 = vadd.f32 %v751, 0.0036580483
      %v753 = vmul.f32 %v748, %v752
      %v754 = vadd.f32 %v753, 0.05243302
      %v755 = vmul.f32 %v748, %v754
      %v756 = vadd.f32 %v755, 0.18741608
      %v757 = vmul.f32 %v748, %v756
      %v758 = vadd.f32 %v757, 1.1283791
      %v759 = vmul.f32 %v466, %v758
      %v760 = vmul.f32 %v748, 3.8918573e-05
      %v761 = vadd.f32 %v760, 0.001143296
      %v762 = vmul.f32 %v748, %v761
      %v763 = vadd.f32 %v762, 0.014752088
      %v764 = vmul.f32 %v748, %v763
      %v765 = vadd.f32 %v764, 0.112945676
      %v766 = vmul.f32 %v748, %v765
      %v767 = vadd.f32 %v766, 0.4994258
      %v768 = vmul.f32 %v748, %v767
      %v769 = vadd.f32 %v768, 1.0
      %v770 = vrcp.pop %v769
      %v771 = vmul.f32 %v769, %v770
      %v772 = vsub.f32 1.0, %v771
      %v773 = vmul.f32 %v770, %v772
      %v774 = vadd.f32 %v770, %v773
      %vm775 = vweird.f32 %v769
      %vm776 = vweird.f32 %v770
      %vm777 = vmor %vm775, %vm776
      %v778 = vsel %vm777, %v770, %v774
      %v779 = vand.u32 2147483647, %v769
      %vm780 = vcmp.eq.f32.partialorder %v779, 8.507059e+37
      %v781 = vand.u32 %v769, 2147483648
      %v782 = vor.u32 1.1754944e-38, %v781
      %v783 = vsel %vm780, %v782, %v778
      %v784 = vmul.f32 %v759, %v783
      %v785 = vmin.f32 %v784, 1.0
      %v786 = vmax.f32 %v785, -1.0
      %v787 = vadd.f32 %v506, 1.0
      %v788 = vadd.f32 %v546, 1.0
      %v789 = vadd.f32 %v586, 1.0
      %v790 = vadd.f32 %v626, 1.0
      %v791 = vadd.f32 %v666, 1.0
      %v792 = vadd.f32 %v706, 1.0
      %v793 = vadd.f32 %v746, 1.0
      %v794 = vadd.f32 %v786, 1.0
      %v795 = vmul.f32 %v451, %v787
      %v796 = vmul.f32 %v452, %v788
      %v797 = vmul.f32 %v453, %v789
      %v798 = vmul.f32 %v454, %v790
      %v799 = vmul.f32 %v455, %v791
      %v800 = vmul.f32 %v456, %v792
      %v801 = vmul.f32 %v457, %v793
      %v802 = vmul.f32 %v458, %v794
      %v803 = vld [vmem:[#allocation2] sm:$0xff]
      %v804 = vld [vmem:[#allocation2 + $0x8] sm:$0xff]
      %v805 = vld [vmem:[#allocation2 + $0x10] sm:$0xff]
      %v806 = vld [vmem:[#allocation2 + $0x18] sm:$0xff]
      %v807 = vld [vmem:[#allocation2 + $0x20] sm:$0xff]
      %v808 = vld [vmem:[#allocation2 + $0x28] sm:$0xff]
      %v809 = vld [vmem:[#allocation2 + $0x30] sm:$0xff]
      %v810 = vld [vmem:[#allocation2 + $0x38] sm:$0xff]
      %v811 = vpack.c.bf16 %v796, %v795
      %v812 = vpack.c.bf16 %v798, %v797
      %v813 = vpack.c.bf16 %v800, %v799
      %v814 = vpack.c.bf16 %v802, %v801
      %v815 = vld [vmem:[%s339] sm:$0xf]
      %v816 = vld [vmem:[%s339 + $0x4] sm:$0xf]
      %v817 = vld [vmem:[%s339 + $0x8] sm:$0xf]
      %v818 = vld [vmem:[%s339 + $0xc] sm:$0xf]
      %v819 = vld [vmem:[%s339 + $0x10] sm:$0xf]
      %v820 = vld [vmem:[%s339 + $0x14] sm:$0xf]
      %v821 = vld [vmem:[%s339 + $0x18] sm:$0xf]
      %v822 = vld [vmem:[%s339 + $0x1c] sm:$0xf]
      %v831 = vunpack.c.l.b16 %v815
      %v832 = vunpack.c.l.b16 %v816
      %v833 = vunpack.c.l.b16 %v817
      %v834 = vunpack.c.l.b16 %v818
      %v835 = vunpack.c.l.b16 %v819
      %v836 = vunpack.c.l.b16 %v820
      %v837 = vunpack.c.l.b16 %v821
      %v838 = vunpack.c.l.b16 %v822
      %v839 = vpack.c.b16 %v832, %v831
      %v840 = vpack.c.b16 %v834, %v833
      %v841 = vpack.c.b16 %v836, %v835
      %v842 = vpack.c.b16 %v838, %v837
      %vm847 = vcmask 523264
      %v849 = vsel %vm847, %v811, 0
      %v852 = vsel %vm847, %v812, 0
      %v855 = vsel %vm847, %v813, 0
      %v858 = vsel %vm847, %v814, 0
      %860 = vmatpush.bf16.msra.mxu0 0
      %861 = vmatpush.bf16.msra.mxu0 0
      %862 = vmatpush.bf16.msra.mxu0 0
      %863 = vmatpush.bf16.msra.mxu0 0
      %864 = vmatpush.bf16.msra.mxu0 %v842
      %865 = vmatpush.bf16.msra.mxu0 %v841
      %866 = vmatpush.bf16.msra.mxu0 %v840
      %867 = vmatpush.bf16.msra.mxu0 %v839
      %868 = vmatmul.bf16.gmra.mxu0 %v849
      %v869 = vpop.f32.mrf.mxu0
      %v870 = vadd.f32 0.0, %v869
      %v871 = vpop.f32.mrf.mxu0
      %v872 = vadd.f32 0.0, %v871
      %873 = vmatmul.bf16.gmra.mxu0 %v852
      %v874 = vpop.f32.mrf.mxu0
      %v875 = vadd.f32 0.0, %v874
      %v876 = vpop.f32.mrf.mxu0
      %v877 = vadd.f32 0.0, %v876
      %878 = vmatmul.bf16.gmra.mxu0 %v855
      %v879 = vpop.f32.mrf.mxu0
      %v880 = vadd.f32 0.0, %v879
      %v881 = vpop.f32.mrf.mxu0
      %v882 = vadd.f32 0.0, %v881
      %883 = vmatmul.bf16.gmra.mxu0 %v858
      %v884 = vpop.f32.mrf.mxu0
      %v885 = vadd.f32 0.0, %v884
      %v886 = vpop.f32.mrf.mxu0
      %v887 = vadd.f32 0.0, %v886
      %888 = vdwg.mxu0
      %v889 = vadd.f32 %v803, %v870
      %v890 = vadd.f32 %v804, %v872
      %v891 = vadd.f32 %v805, %v875
      %v892 = vadd.f32 %v806, %v877
      %v893 = vadd.f32 %v807, %v880
      %v894 = vadd.f32 %v808, %v882
      %v895 = vadd.f32 %v809, %v885
      %v896 = vadd.f32 %v810, %v887
      %897 = vst.msk [vmem:[#allocation2] sm:$0xff] %vm409, %v889
      %898 = vst.msk [vmem:[#allocation2 + $0x8] sm:$0xff] %vm409, %v890
      %899 = vst.msk [vmem:[#allocation2 + $0x10] sm:$0xff] %vm409, %v891
      %900 = vst.msk [vmem:[#allocation2 + $0x18] sm:$0xff] %vm409, %v892
      %901 = vst.msk [vmem:[#allocation2 + $0x20] sm:$0xff] %vm409, %v893
      %902 = vst.msk [vmem:[#allocation2 + $0x28] sm:$0xff] %vm409, %v894
      %903 = vst.msk [vmem:[#allocation2 + $0x30] sm:$0xff] %vm409, %v895
      %904 = vst.msk [vmem:[#allocation2 + $0x38] sm:$0xff] %vm409, %v896
      // Predicated region
      $region53: #{tpu_custom_call.1} parent=47 // pred_check
        %p905 = pneg %p348
      $region54: #{tpu_custom_call.1} parent=47 // pred_check_branch
        %907 = sbr.rel (%p905) target = $region56
      $region55: #{tpu_custom_call.1} parent=47 // pred_region
        %v908 = vld [vmem:[#allocation2] sm:$0xff]
        %v909 = vld [vmem:[#allocation2 + $0x8] sm:$0xff]
        %v910 = vld [vmem:[#allocation2 + $0x10] sm:$0xff]
        %v911 = vld [vmem:[#allocation2 + $0x18] sm:$0xff]
        %v912 = vld [vmem:[#allocation2 + $0x20] sm:$0xff]
        %v913 = vld [vmem:[#allocation2 + $0x28] sm:$0xff]
        %v914 = vld [vmem:[#allocation2 + $0x30] sm:$0xff]
        %v915 = vld [vmem:[#allocation2 + $0x38] sm:$0xff]
        %v916 = vld [vmem:[%s4] sm:$0x1]
        %v918 = vperm.slane %v916, 0
        %v920 = vadd.f32 %v908, %v918
        %v921 = vadd.f32 %v909, %v918
        %v922 = vadd.f32 %v910, %v918
        %v923 = vadd.f32 %v911, %v918
        %v924 = vadd.f32 %v912, %v918
        %v925 = vadd.f32 %v913, %v918
        %v926 = vadd.f32 %v914, %v918
        %v927 = vadd.f32 %v915, %v918
        %v928 = vld [vmem:[%s326] sm:$0xf]
        %v929 = vld [vmem:[%s326 + $0x4] sm:$0xf]
        %v930 = vld [vmem:[%s326 + $0x8] sm:$0xf]
        %v931 = vld [vmem:[%s326 + $0xc] sm:$0xf]
        %v932 = vld [vmem:[%s326 + $0x10] sm:$0xf]
        %v933 = vld [vmem:[%s326 + $0x14] sm:$0xf]
        %v934 = vld [vmem:[%s326 + $0x18] sm:$0xf]
        %v935 = vld [vmem:[%s326 + $0x1c] sm:$0xf]
        %v936 = vunpack.c.l.bf16 %v928
        %v937 = vunpack.c.l.bf16 %v929
        %v938 = vunpack.c.l.bf16 %v930
        %v939 = vunpack.c.l.bf16 %v931
        %v940 = vunpack.c.l.bf16 %v932
        %v941 = vunpack.c.l.bf16 %v933
        %v942 = vunpack.c.l.bf16 %v934
        %v943 = vunpack.c.l.bf16 %v935
        %v944 = vadd.f32 %v920, %v936
        %v945 = vadd.f32 %v921, %v937
        %v946 = vadd.f32 %v922, %v938
        %v947 = vadd.f32 %v923, %v939
        %v948 = vadd.f32 %v924, %v940
        %v949 = vadd.f32 %v925, %v941
        %v950 = vadd.f32 %v926, %v942
        %v951 = vadd.f32 %v927, %v943
        %v952 = vsel %vm409, %v944, 0.0
        %953 = vadd.xlane.f32.xlu0 %v952
        %v954 = vpop.xlane.xlu0 %953
        %v955 = vsel %vm409, %v945, 0.0
        %956 = vadd.xlane.f32.xlu0 %v955
        %v957 = vpop.xlane.xlu0 %956
        %v958 = vsel %vm409, %v946, 0.0
        %959 = vadd.xlane.f32.xlu0 %v958
        %v960 = vpop.xlane.xlu0 %959
        %v961 = vsel %vm409, %v947, 0.0
        %962 = vadd.xlane.f32.xlu0 %v961
        %v963 = vpop.xlane.xlu0 %962
        %v964 = vsel %vm409, %v948, 0.0
        %965 = vadd.xlane.f32.xlu0 %v964
        %v966 = vpop.xlane.xlu0 %965
        %v967 = vsel %vm409, %v949, 0.0
        %968 = vadd.xlane.f32.xlu0 %v967
        %v969 = vpop.xlane.xlu0 %968
        %v970 = vsel %vm409, %v950, 0.0
        %971 = vadd.xlane.f32.xlu0 %v970
        %v972 = vpop.xlane.xlu0 %971
        %v973 = vsel %vm409, %v951, 0.0
        %974 = vadd.xlane.f32.xlu0 %v973
        %v975 = vpop.xlane.xlu0 %974
        %v976 = vrcp.pop 32.0
        %v977 = vmul.f32 32.0, %v976
        %v978 = vsub.f32 1.0, %v977
        %v979 = vmul.f32 %v976, %v978
        %v980 = vadd.f32 %v976, %v979
        %vm981 = vweird.f32 %v976
        %v982 = vsel %vm981, %v976, %v980
        %v983 = vmul.f32 %v954, %v982
        %v984 = vmul.f32 %v957, %v982
        %v985 = vmul.f32 %v960, %v982
        %v986 = vmul.f32 %v963, %v982
        %v987 = vmul.f32 %v966, %v982
        %v988 = vmul.f32 %v969, %v982
        %v989 = vmul.f32 %v972, %v982
        %v990 = vmul.f32 %v975, %v982
        %v991 = vsub.f32 %v944, %v983
        %v992 = vsub.f32 %v945, %v984
        %v993 = vsub.f32 %v946, %v985
        %v994 = vsub.f32 %v947, %v986
        %v995 = vsub.f32 %v948, %v987
        %v996 = vsub.f32 %v949, %v988
        %v997 = vsub.f32 %v950, %v989
        %v998 = vsub.f32 %v951, %v990
        %v999 = vmul.f32 %v991, %v991
        %v1000 = vmul.f32 %v992, %v992
        %v1001 = vmul.f32 %v993, %v993
        %v1002 = vmul.f32 %v994, %v994
        %v1003 = vmul.f32 %v995, %v995
        %v1004 = vmul.f32 %v996, %v996
        %v1005 = vmul.f32 %v997, %v997
        %v1006 = vmul.f32 %v998, %v998
        %v1007 = vsel %vm409, %v999, 0.0
        %1008 = vadd.xlane.f32.xlu0 %v1007
        %v1009 = vpop.xlane.xlu0 %1008
        %v1010 = vsel %vm409, %v1000, 0.0
        %1011 = vadd.xlane.f32.xlu0 %v1010
        %v1012 = vpop.xlane.xlu0 %1011
        %v1013 = vsel %vm409, %v1001, 0.0
        %1014 = vadd.xlane.f32.xlu0 %v1013
        %v1015 = vpop.xlane.xlu0 %1014
        %v1016 = vsel %vm409, %v1002, 0.0
        %1017 = vadd.xlane.f32.xlu0 %v1016
        %v1018 = vpop.xlane.xlu0 %1017
        %v1019 = vsel %vm409, %v1003, 0.0
        %1020 = vadd.xlane.f32.xlu0 %v1019
        %v1021 = vpop.xlane.xlu0 %1020
        %v1022 = vsel %vm409, %v1004, 0.0
        %1023 = vadd.xlane.f32.xlu0 %v1022
        %v1024 = vpop.xlane.xlu0 %1023
        %v1025 = vsel %vm409, %v1005, 0.0
        %1026 = vadd.xlane.f32.xlu0 %v1025
        %v1027 = vpop.xlane.xlu0 %1026
        %v1028 = vsel %vm409, %v1006, 0.0
        %1029 = vadd.xlane.f32.xlu0 %v1028
        %v1030 = vpop.xlane.xlu0 %1029
        %v1031 = vmul.f32 %v1009, %v982
        %v1032 = vmul.f32 %v1012, %v982
        %v1033 = vmul.f32 %v1015, %v982
        %v1034 = vmul.f32 %v1018, %v982
        %v1035 = vmul.f32 %v1021, %v982
        %v1036 = vmul.f32 %v1024, %v982
        %v1037 = vmul.f32 %v1027, %v982
        %v1038 = vmul.f32 %v1030, %v982
        %v1039 = vadd.f32 %v1031, 1e-05
        %v1040 = vadd.f32 %v1032, 1e-05
        %v1041 = vadd.f32 %v1033, 1e-05
        %v1042 = vadd.f32 %v1034, 1e-05
        %v1043 = vadd.f32 %v1035, 1e-05
        %v1044 = vadd.f32 %v1036, 1e-05
        %v1045 = vadd.f32 %v1037, 1e-05
        %v1046 = vadd.f32 %v1038, 1e-05
        %v1047 = vrsqrt.pop %v1039
        %v1048 = vmul.f32 %v1047, %v1039
        %v1049 = vmul.f32 %v1048, %v1047
        %v1050 = vmul.f32 0.5, %v1049
        %v1051 = vsub.f32 1.5, %v1050
        %v1052 = vmul.f32 %v1047, %v1051
        %vm1053 = vweird.f32 %v1039
        %vm1054 = vweird.f32 %v1047
        %vm1055 = vmor %vm1053, %vm1054
        %v1056 = vsel %vm1055, %v1047, %v1052
        %v1057 = vrsqrt.pop %v1040
        %v1058 = vmul.f32 %v1057, %v1040
        %v1059 = vmul.f32 %v1058, %v1057
        %v1060 = vmul.f32 0.5, %v1059
        %v1061 = vsub.f32 1.5, %v1060
        %v1062 = vmul.f32 %v1057, %v1061
        %vm1063 = vweird.f32 %v1040
        %vm1064 = vweird.f32 %v1057
        %vm1065 = vmor %vm1063, %vm1064
        %v1066 = vsel %vm1065, %v1057, %v1062
        %v1067 = vrsqrt.pop %v1041
        %v1068 = vmul.f32 %v1067, %v1041
        %v1069 = vmul.f32 %v1068, %v1067
        %v1070 = vmul.f32 0.5, %v1069
        %v1071 = vsub.f32 1.5, %v1070
        %v1072 = vmul.f32 %v1067, %v1071
        %vm1073 = vweird.f32 %v1041
        %vm1074 = vweird.f32 %v1067
        %vm1075 = vmor %vm1073, %vm1074
        %v1076 = vsel %vm1075, %v1067, %v1072
        %v1077 = vrsqrt.pop %v1042
        %v1078 = vmul.f32 %v1077, %v1042
        %v1079 = vmul.f32 %v1078, %v1077
        %v1080 = vmul.f32 0.5, %v1079
        %v1081 = vsub.f32 1.5, %v1080
        %v1082 = vmul.f32 %v1077, %v1081
        %vm1083 = vweird.f32 %v1042
        %vm1084 = vweird.f32 %v1077
        %vm1085 = vmor %vm1083, %vm1084
        %v1086 = vsel %vm1085, %v1077, %v1082
        %v1087 = vrsqrt.pop %v1043
        %v1088 = vmul.f32 %v1087, %v1043
        %v1089 = vmul.f32 %v1088, %v1087
        %v1090 = vmul.f32 0.5, %v1089
        %v1091 = vsub.f32 1.5, %v1090
        %v1092 = vmul.f32 %v1087, %v1091
        %vm1093 = vweird.f32 %v1043
        %vm1094 = vweird.f32 %v1087
        %vm1095 = vmor %vm1093, %vm1094
        %v1096 = vsel %vm1095, %v1087, %v1092
        %v1097 = vrsqrt.pop %v1044
        %v1098 = vmul.f32 %v1097, %v1044
        %v1099 = vmul.f32 %v1098, %v1097
        %v1100 = vmul.f32 0.5, %v1099
        %v1101 = vsub.f32 1.5, %v1100
        %v1102 = vmul.f32 %v1097, %v1101
        %vm1103 = vweird.f32 %v1044
        %vm1104 = vweird.f32 %v1097
        %vm1105 = vmor %vm1103, %vm1104
        %v1106 = vsel %vm1105, %v1097, %v1102
        %v1107 = vrsqrt.pop %v1045
        %v1108 = vmul.f32 %v1107, %v1045
        %v1109 = vmul.f32 %v1108, %v1107
        %v1110 = vmul.f32 0.5, %v1109
        %v1111 = vsub.f32 1.5, %v1110
        %v1112 = vmul.f32 %v1107, %v1111
        %vm1113 = vweird.f32 %v1045
        %vm1114 = vweird.f32 %v1107
        %vm1115 = vmor %vm1113, %vm1114
        %v1116 = vsel %vm1115, %v1107, %v1112
        %v1117 = vrsqrt.pop %v1046
        %v1118 = vmul.f32 %v1117, %v1046
        %v1119 = vmul.f32 %v1118, %v1117
        %v1120 = vmul.f32 0.5, %v1119
        %v1121 = vsub.f32 1.5, %v1120
        %v1122 = vmul.f32 %v1117, %v1121
        %vm1123 = vweird.f32 %v1046
        %vm1124 = vweird.f32 %v1117
        %vm1125 = vmor %vm1123, %vm1124
        %v1126 = vsel %vm1125, %v1117, %v1122
        %v1127 = vmul.f32 %v991, %v1056
        %v1128 = vmul.f32 %v992, %v1066
        %v1129 = vmul.f32 %v993, %v1076
        %v1130 = vmul.f32 %v994, %v1086
        %v1131 = vmul.f32 %v995, %v1096
        %v1132 = vmul.f32 %v996, %v1106
        %v1133 = vmul.f32 %v997, %v1116
        %v1134 = vmul.f32 %v998, %v1126
        %v1135 = vld [vmem:[%s5] sm:$0x1]
        %v1137 = vperm.slane %v1135, 0
        %v1139 = vmul.f32 %v1127, %v1137
        %v1140 = vmul.f32 %v1128, %v1137
        %v1141 = vmul.f32 %v1129, %v1137
        %v1142 = vmul.f32 %v1130, %v1137
        %v1143 = vmul.f32 %v1131, %v1137
        %v1144 = vmul.f32 %v1132, %v1137
        %v1145 = vmul.f32 %v1133, %v1137
        %v1146 = vmul.f32 %v1134, %v1137
        %v1147 = vld [vmem:[%s6] sm:$0x1]
        %v1149 = vperm.slane %v1147, 0
        %v1151 = vadd.f32 %v1139, %v1149
        %v1152 = vadd.f32 %v1140, %v1149
        %v1153 = vadd.f32 %v1141, %v1149
        %v1154 = vadd.f32 %v1142, %v1149
        %v1155 = vadd.f32 %v1143, %v1149
        %v1156 = vadd.f32 %v1144, %v1149
        %v1157 = vadd.f32 %v1145, %v1149
        %v1158 = vadd.f32 %v1146, %v1149
        %1159 = vst.msk [vmem:[%s345] sm:$0xff] %vm409, %v1151
        %1160 = vst.msk [vmem:[%s345 + $0x8] sm:$0xff] %vm409, %v1152
        %1161 = vst.msk [vmem:[%s345 + $0x10] sm:$0xff] %vm409, %v1153
        %1162 = vst.msk [vmem:[%s345 + $0x18] sm:$0xff] %vm409, %v1154
        %1163 = vst.msk [vmem:[%s345 + $0x20] sm:$0xff] %vm409, %v1155
        %1164 = vst.msk [vmem:[%s345 + $0x28] sm:$0xff] %vm409, %v1156
        %1165 = vst.msk [vmem:[%s345 + $0x30] sm:$0xff] %vm409, %v1157
        %1166 = vst.msk [vmem:[%s345 + $0x38] sm:$0xff] %vm409, %v1158
      $region56: #{tpu_custom_call.1} parent=47 // pred_fallthru
        _
      %s1167 = smul.u32 8, %s22
      %p1168 = scmp.lt.s32.totalorder %s1167, 15
      %s1169 = scalar_select %p1168, %s1167, 15
      %s1170 = smul.addr %s1169, 8
      %s1171 = scalar_lea.vmem %s7, %s1170
      // Predicated region
      $region57: #{tpu_custom_call.1} parent=47 // pred_check
        %p1172 = pneg %p215
      $region58: #{tpu_custom_call.1} parent=47 // pred_check_branch
        %1174 = sbr.rel (%p1172) target = $region60
      $region59: #{tpu_custom_call.1} parent=47 // pred_region
        %s1175 = smul.u32 8, %s22
      $region60: #{tpu_custom_call.1} parent=47 // pred_fallthru
        _
    $region48: #{tpu_custom_call.1} parent=5 // pred_fallthru
      _
    %p1176 = scmp.le.s32.totalorder 2, %s13
    // Predicated region
    $region61: #{tpu_custom_call.1} parent=5 // pred_check
      %p1177 = pneg %p1176
    $region62: #{tpu_custom_call.1} parent=5 // pred_check_branch
      %1179 = sbr.rel (%p1177) target = $region64
    $region63: #{tpu_custom_call.1} parent=5 // pred_region
      %s1180 = ssub.s32 %s13, 2
      // Predicated region
      $region65: #{tpu_custom_call.1} parent=63 // pred_check
        %p1181 = pneg %p221
      $region66: #{tpu_custom_call.1} parent=63 // pred_check_branch
        %1183 = sbr.rel (%p1181) target = $region68
      $region67: #{tpu_custom_call.1} parent=63 // pred_region
        %s1184 = smul.u32 8, %s24
        %p1185 = scmp.lt.s32.totalorder %s1184, 15
        %s1186 = scalar_select %p1185, %s1184, 15
        %s1187 = smul.addr %s1186, 8
        %s1188 = scalar_lea.vmem %s7, %s1187
      $region68: #{tpu_custom_call.1} parent=63 // pred_fallthru
        _
    $region64: #{tpu_custom_call.1} parent=5 // pred_fallthru
      _
  $region6: #{tpu_custom_call.1} parent=0 // loop_footer
    %s17 = sadd.s32 1, %s13
  $region7: #{tpu_custom_call.1} parent=0 // loop_footer_branch
    %12 = sbr.rel target = $region3
  $region8: #{tpu_custom_call.1} parent=0 // loop_exit
    _

</llo_original>
